<compile_context>
chip_gen: v7x
topology: tpu7x:2x2x1
jax: 0.10.0
libtpu: 0.0.40
codegen_flags: <defaults>
</compile_context>

<pallas_src>
import jax
import jax.numpy as jnp
from jax.experimental import pallas as pl
from jax.experimental.pallas import tpu as pltpu

_LANE = 128
_SUBLANE = 8
_MIN_BYTES_FOR_SPLIT = 512 * 1024  # below this, a single block is fine


def _copy_kernel(x_ref, o_ref):
    # Pure dense copy of one tile: unmasked vld/vst, no relayout, no compute.
    o_ref[...] = x_ref[...]


def _tile_bytes_cap() -> int:
    """Per-tile byte budget. ~2 MiB is at the roofline plateau on v5e/v6e;
    v7x's faster HBM wants ~4 MiB tiles to amortize grid-step overhead while
    keeping double-buffered in+out residency (<=16 MiB) under its 32 MiB
    scoped / 64 MiB physical VMEM."""
    cap = 2 * 1024 * 1024
    try:
        info = pltpu.get_tpu_info()
        vmem = getattr(info, "vmem_capacity_bytes", None)
        if vmem is not None and vmem <= 64 * 1024 * 1024:  # v7x-class core
            cap = 4 * 1024 * 1024
    except Exception:
        pass  # conservative default works on every generation
    return cap


def _slab_tiling(total: int, itemsize: int):
    """Pick (R, C, TR) for a sublane/lane-dense (R, C) view of `total` elems.

    Returns None if no 128-multiple column width divides `total`.
    """
    if total % _LANE != 0:
        return None

    candidates = (1024, 512, 256, 128)
    # Prefer a column width whose row count is a multiple of 8 (fully dense
    # vregs); otherwise take the widest lane-dense column that divides total.
    choice = None
    for c in candidates:
        if total % c == 0 and (total // c) % _SUBLANE == 0:
            choice = c
            break
    if choice is None:
        for c in candidates:
            if total % c == 0:
                choice = c
                break
    c = choice
    r = total // c

    # Row-tile sized by the per-chip byte cap, in multiples of 8 sublanes.
    cap = _tile_bytes_cap()
    tr = max(_SUBLANE, (cap // (c * itemsize) // _SUBLANE) * _SUBLANE)

    # Guarantee >= 2 grid steps for non-tiny arrays: enables DMA
    # double-buffering and lets "parallel" shard across v7x's two TCs.
    total_bytes = total * itemsize
    if total_bytes > _MIN_BYTES_FOR_SPLIT and r >= 2 * _SUBLANE:
        half = max(_SUBLANE, (((r + 1) // 2) // _SUBLANE) * _SUBLANE)
        tr = min(tr, half)

    if tr >= r:
        tr = r  # tiny input: single full-extent block (trivially legal tiling)
    return r, c, tr


def _feature_tile(n: int, flat: int, itemsize: int) -> int:
    """Fallback tiling over the (n, flat) view when total % 128 != 0.
    Keeps tf a multiple of 128 (masked edge block), never one whole-array
    block for large inputs."""
    cap = _tile_bytes_cap()
    tf = max(_LANE, (cap // max(1, n * itemsize) // _LANE) * _LANE)
    total_bytes = n * flat * itemsize
    if total_bytes > _MIN_BYTES_FOR_SPLIT and flat >= 2 * _LANE:
        half = max(_LANE, (((flat + 1) // 2) // _LANE) * _LANE)
        tf = min(tf, half)
    if tf >= flat:
        tf = flat  # tiny input: full-extent block
    return tf


def flatten_layer(x: jax.Array) -> jax.Array:
    """Pallas equivalent of FlattenLayer.forward: x.view(x.shape[0], -1)."""
    n = x.shape[0]
    flat = 1
    for d in x.shape[1:]:
        flat *= d

    itemsize = jnp.dtype(x.dtype).itemsize
    total = n * flat

    cost = pl.CostEstimate(
        flops=0, transcendentals=0, bytes_accessed=2 * total * itemsize
    )
    cparams = pltpu.CompilerParams(
        dimension_semantics=("parallel",),   # shards grid across v7x's 2 TCs
        vmem_limit_bytes=32 * 1024 * 1024,   # explicit, safe on every chip
    )

    tiling = _slab_tiling(total, itemsize)
    if tiling is not None:
        r, c, tr = tiling
        # Metadata-only row-major reinterpretation: (N, C, H, W) -> (R, C).
        slab = x.reshape(r, c)
        out = pl.pallas_call(
            _copy_kernel,
            out_shape=jax.ShapeDtypeStruct((r, c), x.dtype),
            grid=(pl.cdiv(r, tr),),
            in_specs=[pl.BlockSpec((tr, c), lambda i: (i, 0))],
            out_specs=pl.BlockSpec((tr, c), lambda i: (i, 0)),
            compiler_params=cparams,
            cost_estimate=cost,
        )(slab)
        return out.reshape(n, flat)  # metadata-only

    # Fallback: element count not divisible by 128. Lane-dense feature tiles
    # over the (n, flat) view; the last grid step is a masked partial block.
    x2 = x.reshape(n, flat)
    tf = _feature_tile(n, flat, itemsize)
    return pl.pallas_call(
        _copy_kernel,
        out_shape=jax.ShapeDtypeStruct((n, flat), x.dtype),
        grid=(pl.cdiv(flat, tf),),
        in_specs=[pl.BlockSpec((n, tf), lambda j: (0, j))],
        out_specs=pl.BlockSpec((n, tf), lambda j: (0, j)),
        compiler_params=cparams,
        cost_estimate=cost,
    )(x2)


if __name__ == "__main__":
    key = jax.random.PRNGKey(0)
    # Small NCHW input consistent with a conv-feature-map -> FC flatten.
    x = jax.random.normal(key, (2, 4, 16, 16), dtype=jnp.float32)

    y = flatten_layer(x)
    y = jax.block_until_ready(y)

    expected = x.reshape(x.shape[0], -1)
    assert y.shape == (2, 4 * 16 * 16), y.shape
    assert y.dtype == x.dtype
    assert bool(jnp.array_equal(y, expected))

    print("KERNEL_OK")
</pallas_src>

<mosaic_0001>
module attributes {stable_mosaic.version = 11 : i64} {
  func.func @_copy_kernel(%arg0: i32, %arg1: memref<8x256xf32, #tpu.memory_space<vmem>>, %arg2: memref<8x256xf32, #tpu.memory_space<vmem>>) attributes {dimension_semantics = [#tpu.dimension_semantics<parallel>], iteration_bounds = array<i64: 1>, scalar_prefetch = 0 : i64, scratch_operands = 0 : i64, tpu.core_type = #tpu.core_type<tc>, window_params = [{transform_indices = @transform_0, window_bounds = array<i64: 8, 256>}, {transform_indices = @transform_1, window_bounds = array<i64: 8, 256>}]} {
    %c0 = arith.constant 0 : index
    %c0_0 = arith.constant 0 : index
    %0 = vector.load %arg1[%c0, %c0_0] : memref<8x256xf32, #tpu.memory_space<vmem>>, vector<8x256xf32>
    %c0_1 = arith.constant 0 : index
    %c0_2 = arith.constant 0 : index
    %1 = vector.load %arg2[%c0_1, %c0_2] : memref<8x256xf32, #tpu.memory_space<vmem>>, vector<8x256xf32>
    tpu.vector_store %arg2[%c0_1, %c0_2], %0 {strides = array<i32>} : memref<8x256xf32, #tpu.memory_space<vmem>>, vector<8x256xf32>,
    return
  }
  func.func @transform_0(%arg0: i32) -> (i32, i32) {
    %c0_i32 = arith.constant 0 : i32
    %c0_i32_0 = arith.constant 0 : i32
    return %arg0, %c0_i32 : i32, i32
  }
  func.func @transform_1(%arg0: i32) -> (i32, i32) {
    %c0_i32 = arith.constant 0 : i32
    %c0_i32_0 = arith.constant 0 : i32
    return %arg0, %c0_i32 : i32, i32
  }
}

</mosaic_0001>

<llo_original>
// kernel: tpu_custom_call.1
$region0: #{tpu_custom_call.1}
  #allocation0 [shape = 'u32[]', space=smem, size = 0x4, offset = 0x4, fixed_abs, tag = 'smem constant byte address 0x4 - core index']
  #allocation1 [shape = 'u32[144,128]{1,0:T(1,128)}', space=vmem, size = 0x12000, scoped, tag = 'internal scratch']
  %s0 = inlined_call_operand.hbm [shape: f32[8,256], index: 0, kind: input, shape index: {}]
  %s1 = inlined_call_operand.hbm [shape: f32[8,256], index: 1, kind: output, shape index: {}]
  %s2 = sld [smem:[#allocation0]]
  $region18: #{tpu_custom_call.1} parent=0
    _
  %s4 = ssub.s32 1, %s2
  %s5 = scalar_select 0, %s4, %s2
  $region1: #{tpu_custom_call.1} parent=0
    #allocation2 [shape = 'u8[8192]{0}', space=vmem, size = 0x2000, scoped, tag = 'input window, operand 0, single buffered']
    #allocation3 [shape = 's32[1]{0}', space=sflag, size = 0x4, scoped, tag = 'scoped memory for tpu_custom_call.1']
    #allocation4 [shape = 's32[1]{0}', space=sflag, size = 0x4, scoped, tag = 'scoped memory for tpu_custom_call.1']
    #allocation5 [shape = 'u8[8192]{0}', space=vmem, size = 0x2000, scoped, tag = 'output window, operand 0, single buffered']
    %6 = vsyncpa [#allocation3], 0
    %7 = vsyncpa [#allocation4], 0
    // Predicated region
    $region2: #{tpu_custom_call.1} parent=1 // pred_check
      _
    $region3: #{tpu_custom_call.1} parent=1 // pred_check_branch
      %9 = sbr.rel (0) target = $region5
    $region4: #{tpu_custom_call.1} parent=1 // pred_region
      %s11 = ssub.s32 256, 256
      %12 = vsyncadd [#allocation3], %s11
      %s14 = sshll.u32 [#allocation2], 4
      %s15 = int_to_ptr.vmem [resolvable:$true] %s14
      %17 = dma.hbm_to_vmem [thread:$0]  %s0, 256, %s15, [#allocation3]
    $region5: #{tpu_custom_call.1} parent=1 // pred_fallthru
      _
    // Predicated region
    $region6: #{tpu_custom_call.1} parent=1 // pred_check
      _
    $region7: #{tpu_custom_call.1} parent=1 // pred_check_branch
      %19 = sbr.rel (0) target = $region9
    $region8: #{tpu_custom_call.1} parent=1 // pred_region
      %20 = dma.done [#allocation3], 256
    $region9: #{tpu_custom_call.1} parent=1 // pred_fallthru
      _
    %v21 = vld [vmem:[#allocation2] sm:$0xff]
    %v22 = vld [vmem:[#allocation2 + $0x8] sm:$0xff]
    %23 = vst [vmem:[#allocation5] sm:$0xff] %v21
    %24 = vst [vmem:[#allocation5 + $0x8] sm:$0xff] %v22
    // Predicated region
    $region10: #{tpu_custom_call.1} parent=1 // pred_check
      _
    $region11: #{tpu_custom_call.1} parent=1 // pred_check_branch
      %26 = sbr.rel (0) target = $region13
    $region12: #{tpu_custom_call.1} parent=1 // pred_region
      %s28 = ssub.s32 256, 256
      %29 = vsyncadd [#allocation4], %s28
      %s31 = sshll.u32 [#allocation5], 4
      %s32 = int_to_ptr.vmem [resolvable:$true] %s31
      %34 = dma.vmem_to_hbm [thread:$0]  %s32, 256, %s1, [#allocation4]
    $region13: #{tpu_custom_call.1} parent=1 // pred_fallthru
      _
    // Predicated region
    $region14: #{tpu_custom_call.1} parent=1 // pred_check
      _
    $region15: #{tpu_custom_call.1} parent=1 // pred_check_branch
      %36 = sbr.rel (0) target = $region17
    $region16: #{tpu_custom_call.1} parent=1 // pred_region
      %37 = dma.done [#allocation4], 256
    $region17: #{tpu_custom_call.1} parent=1 // pred_fallthru
      _
    %38 = vsyncpa [#allocation3], 1
    %39 = vsyncpa [#allocation4], 1

</llo_original>
